<compile_context>
chip_gen: v5e
topology: v5e:2x2
jax: 0.10.0
libtpu: 0.0.40
codegen_flags: <defaults>
</compile_context>

<pallas_src>
import jax
import jax.numpy as jnp
from jax.experimental import pallas as pl
from jax.experimental.pallas import tpu as pltpu


def _attention_kernel(x_ref, o_ref):
    # One (T, TH) tile per grid step: softmax over axis 0 + elementwise mul.
    # All ops are per-lane (per hidden column), so any garbage in masked
    # boundary lanes stays in those lanes and is dropped by the masked store.
    x = x_ref[...]
    xf = x.astype(jnp.float32)
    m = jnp.max(xf, axis=0, keepdims=True)             # [1, TH]
    e = jnp.exp(xf - m)                                 # [T, TH]
    s = jnp.sum(e, axis=0, keepdims=True)               # [1, TH]
    # Exact reciprocal (one divide per column, then broadcast multiply).
    # The kernel is memory bound, so the exact divide is free under the DMA
    # and keeps 1e-5 parity with PyTorch's softmax.
    probs = e * (jnp.float32(1.0) / s)                   # [T, TH]
    o_ref[...] = (xf * probs).astype(o_ref.dtype)


def _vmem_capacity_bytes():
    """Physical VMEM per TensorCore; conservative (v7x) fallback if unknown."""
    try:
        return int(pltpu.get_tpu_info().vmem_capacity_bytes)
    except Exception:
        return 64 * 1024 * 1024


def _choose_hidden_tile(t, h, itemsize, budget_bytes):
    """Lane-dense hidden-tile width chosen from a VMEM byte budget.

    Working set per tile: 2x double-buffered input + 2x double-buffered output
    (native dtype) plus ~3 f32 temporaries inside the kernel body.
    Returns None when even a 128-lane tile would blow the budget (very long T).
    """
    bytes_per_column = t * (2 * 2 * itemsize + 3 * 4)
    max_th = (budget_bytes // max(bytes_per_column, 1)) // 128 * 128
    if max_th < 128:
        return None

    h_lanes = pl.cdiv(h, 128) * 128                      # lane-padded width
    th = min(max_th, h_lanes)

    # Keep >= 2 grid steps whenever there is enough width so the "parallel"
    # axis actually shards across both TensorCores on v7x (free on v5e/v6e).
    if h_lanes >= 256:
        th = min(th, pl.cdiv(h_lanes // 2, 128) * 128)

    # Balance tile widths across the resulting number of grid steps.
    n_steps = pl.cdiv(h_lanes, th)
    th = 128 * pl.cdiv(h_lanes // 128, n_steps)
    return th


def attention_forward(inputs):
    """inputs: [time_steps, hidden_size] float array."""
    t, h = inputs.shape
    itemsize = jnp.dtype(inputs.dtype).itemsize

    vmem_bytes = _vmem_capacity_bytes()
    # ~1/4 of VMEM for the pipelined tile working set; rest is headroom for
    # Mosaic internal scratch / deeper pipelining.
    th = _choose_hidden_tile(t, h, itemsize, vmem_bytes // 4)
    if th is None:
        # TODO(synk): add a T-tiled two-pass (online m/l) column softmax for
        # extremely long sequences; fall back to the fused XLA path for now.
        return attention_reference(inputs)

    if th >= h:
        # Single full-width block: block_shape equals the array dims, so no
        # lane padding or boundary masking is needed (covers small / ragged h).
        th = h
    grid = (pl.cdiv(h, th),)

    out = pl.pallas_call(
        _attention_kernel,
        out_shape=jax.ShapeDtypeStruct((t, h), inputs.dtype),
        grid=grid,
        in_specs=[pl.BlockSpec((t, th), lambda i: (0, i))],
        out_specs=pl.BlockSpec((t, th), lambda i: (0, i)),
        compiler_params=pltpu.CompilerParams(
            # Hidden tiles are independent -> shard across TensorCores (v7x).
            dimension_semantics=("parallel",),
            vmem_limit_bytes=int(vmem_bytes * 3 // 4),
        ),
    )(inputs)
    return out


def attention_reference(inputs):
    """Pure-JAX reference mirroring the PyTorch forward exactly."""
    a = jnp.transpose(inputs, (1, 0))
    a_probs = jax.nn.softmax(a, axis=-1)
    a_probs = jnp.transpose(a_probs, (1, 0))
    return inputs * a_probs


if __name__ == "__main__":
    # Module has no learned parameters; hidden_size / time_steps only set attrs.
    key = jax.random.PRNGKey(0)

    # Primary shape from the module spec: time_steps=8, hidden_size=32.
    time_steps, hidden_size = 8, 32
    x = jax.random.normal(key, (time_steps, hidden_size), dtype=jnp.float32)
    out = jax.block_until_ready(attention_forward(x))
    ref = attention_reference(x)
    assert out.shape == ref.shape
    assert jnp.allclose(out, ref, atol=1e-5, rtol=1e-5), "mismatch vs reference"

    # Multi-tile path (grid > 1, even hidden split).
    x2 = jax.random.normal(jax.random.PRNGKey(1), (16, 384), dtype=jnp.float32)
    out2 = jax.block_until_ready(attention_forward(x2))
    ref2 = attention_reference(x2)
    assert jnp.allclose(out2, ref2, atol=1e-5, rtol=1e-5), "mismatch (tiled path)"

    # Ragged hidden width that is not a multiple of the tile: exercises the
    # masked boundary block (no wrapper pad/slice).
    x3 = jax.random.normal(jax.random.PRNGKey(2), (16, 200), dtype=jnp.float32)
    out3 = jax.block_until_ready(attention_forward(x3))
    ref3 = attention_reference(x3)
    assert jnp.allclose(out3, ref3, atol=1e-5, rtol=1e-5), "mismatch (ragged path)"

    print("KERNEL_OK")
</pallas_src>

<mosaic_0001>
module attributes {stable_mosaic.version = 11 : i64} {
  func.func @_attention_kernel(%arg0: i32, %arg1: memref<8x32xf32, #tpu.memory_space<vmem>>, %arg2: memref<8x32xf32, #tpu.memory_space<vmem>>) attributes {dimension_semantics = [#tpu.dimension_semantics<parallel>], iteration_bounds = array<i64: 1>, scalar_prefetch = 0 : i64, scratch_operands = 0 : i64, tpu.core_type = #tpu.core_type<tc>, window_params = [{transform_indices = @transform_0, window_bounds = array<i64: 8, 32>}, {transform_indices = @transform_1, window_bounds = array<i64: 8, 32>}]} {
    %c0 = arith.constant 0 : index
    %c0_0 = arith.constant 0 : index
    %0 = vector.load %arg1[%c0, %c0_0] : memref<8x32xf32, #tpu.memory_space<vmem>>, vector<8x32xf32>
    %cst = arith.constant dense<0xFF800000> : vector<32xf32>
    %1 = vector.multi_reduction <maximumf>, %0, %cst [0] : vector<8x32xf32> to vector<32xf32>
    %2 = vector.shape_cast %1 : vector<32xf32> to vector<1x32xf32>
    %3 = vector.broadcast %2 : vector<1x32xf32> to vector<8x32xf32>
    %4 = arith.subf %0, %3 : vector<8x32xf32>
    %5 = math.exp %4 : vector<8x32xf32>
    %cst_1 = arith.constant dense<0.000000e+00> : vector<32xf32>
    %6 = vector.multi_reduction <add>, %5, %cst_1 [0] : vector<8x32xf32> to vector<32xf32>
    %7 = vector.shape_cast %6 : vector<32xf32> to vector<1x32xf32>
    %cst_2 = arith.constant 1.000000e+00 : f32
    %8 = vector.broadcast %cst_2 : f32 to vector<1x32xf32>
    %9 = arith.divf %8, %7 : vector<1x32xf32>
    %10 = vector.broadcast %9 : vector<1x32xf32> to vector<8x32xf32>
    %11 = arith.mulf %5, %10 : vector<8x32xf32>
    %12 = arith.mulf %0, %11 : vector<8x32xf32>
    %c0_3 = arith.constant 0 : index
    %c0_4 = arith.constant 0 : index
    %13 = vector.load %arg2[%c0_3, %c0_4] : memref<8x32xf32, #tpu.memory_space<vmem>>, vector<8x32xf32>
    tpu.vector_store %arg2[%c0_3, %c0_4], %12 {strides = array<i32>} : memref<8x32xf32, #tpu.memory_space<vmem>>, vector<8x32xf32>,
    return
  }
  func.func @transform_0(%arg0: i32) -> (i32, i32) {
    %c0_i32 = arith.constant 0 : i32
    %c0_i32_0 = arith.constant 0 : i32
    return %c0_i32, %arg0 : i32, i32
  }
  func.func @transform_1(%arg0: i32) -> (i32, i32) {
    %c0_i32 = arith.constant 0 : i32
    %c0_i32_0 = arith.constant 0 : i32
    return %c0_i32, %arg0 : i32, i32
  }
}

</mosaic_0001>

<llo_original>
// kernel: tpu_custom_call.1
$region0: #{tpu_custom_call.1}
  #allocation0 [shape = 'u32[]', space=smem, size = 0x4, offset = 0x4, fixed_abs, tag = 'smem constant byte address 0x4 - core index']
  #allocation1 [shape = 'u32[72,128]{1,0:T(1,128)}', space=vmem, size = 0x9000, scoped, tag = 'internal scratch']
  %s0 = inlined_call_operand.hbm [shape: f32[8,32], index: 0, kind: input, shape index: {}]
  %s1 = inlined_call_operand.hbm [shape: f32[8,32], index: 1, kind: output, shape index: {}]
  %s2 = sld [smem:[#allocation0]]
  $region18: #{tpu_custom_call.1} parent=0
    _
  %s4 = ssub.s32 1, %s2
  %s5 = scalar_select 0, %s4, %s2
  $region1: #{tpu_custom_call.1} parent=0
    #allocation2 [shape = 'u8[4096]{0}', space=vmem, size = 0x1000, scoped, tag = 'input window, operand 0, single buffered']
    #allocation3 [shape = 's32[1]{0}', space=sflag, size = 0x4, scoped, tag = 'scoped memory for tpu_custom_call.1']
    #allocation4 [shape = 's32[1]{0}', space=sflag, size = 0x4, scoped, tag = 'scoped memory for tpu_custom_call.1']
    #allocation5 [shape = 'u8[4096]{0}', space=vmem, size = 0x1000, scoped, tag = 'output window, operand 0, single buffered']
    %6 = vsyncpa [#allocation3], 0
    %7 = vsyncpa [#allocation4], 0
    // Predicated region
    $region2: #{tpu_custom_call.1} parent=1 // pred_check
      _
    $region3: #{tpu_custom_call.1} parent=1 // pred_check_branch
      %9 = sbr.rel (0) target = $region5
    $region4: #{tpu_custom_call.1} parent=1 // pred_region
      %11 = vsyncadd [#allocation3], 0
      %s13 = sshll.u32 %s0, 4
      %s14 = int_to_ptr.hbm [resolvable:$true] %s13
      %s15 = sshll.u32 [#allocation2], 4
      %s16 = int_to_ptr.vmem [resolvable:$true] %s15
      %18 = dma.hbm_to_vmem [thread:$0]  %s14, 128, %s16, [#allocation3]
    $region5: #{tpu_custom_call.1} parent=1 // pred_fallthru
      _
    // Predicated region
    $region6: #{tpu_custom_call.1} parent=1 // pred_check
      _
    $region7: #{tpu_custom_call.1} parent=1 // pred_check_branch
      %20 = sbr.rel (0) target = $region9
    $region8: #{tpu_custom_call.1} parent=1 // pred_region
      %22 = dma.done [#allocation3], 128
    $region9: #{tpu_custom_call.1} parent=1 // pred_fallthru
      _
    %v23 = vld [vmem:[#allocation2] sm:$0xff]
    %vm24 = vcmask 261120
    %v25 = vsel %vm24, %v23, -inf
    %v26 = vrot.slane %v25, 4
    %v27 = vmax.f32 %v25, %v26
    %v28 = vrot.slane %v27, 2
    %v29 = vmax.f32 %v27, %v28
    %v30 = vrot.slane %v29, 1
    %v31 = vmax.f32 %v29, %v30
    %v32 = vsub.f32 %v23, %v31
    %v33 = vmul.f32 %v32, 1.442695
    %v34 = vpow.pop %v33
    %v35 = vsel %vm24, %v34, 0.0
    %v36 = vrot.slane %v35, 4
    %v37 = vadd.f32 %v35, %v36
    %v38 = vrot.slane %v37, 2
    %v39 = vadd.f32 %v37, %v38
    %v40 = vrot.slane %v39, 1
    %v41 = vadd.f32 %v39, %v40
    %v42 = vrcp.pop %v41
    %v43 = vmul.f32 %v41, %v42
    %v44 = vsub.f32 1.0, %v43
    %v45 = vmul.f32 %v42, %v44
    %v46 = vadd.f32 %v42, %v45
    %vm47 = vweird.f32 %v41
    %vm48 = vweird.f32 %v42
    %vm49 = vmor %vm47, %vm48
    %v50 = vsel %vm49, %v42, %v46
    %v51 = vand.u32 2147483647, %v41
    %vm52 = vcmp.eq.f32.partialorder %v51, 8.507059e+37
    %v53 = vand.u32 %v41, 2147483648
    %v54 = vor.u32 1.1754944e-38, %v53
    %v55 = vsel %vm52, %v54, %v50
    %v56 = vmul.f32 1.0, %v55
    %v57 = vmul.f32 %v34, %v56
    %v58 = vmul.f32 %v23, %v57
    %59 = vst.msk [vmem:[#allocation5] sm:$0xff] %vm24, %v58
    // Predicated region
    $region10: #{tpu_custom_call.1} parent=1 // pred_check
      _
    $region11: #{tpu_custom_call.1} parent=1 // pred_check_branch
      %61 = sbr.rel (0) target = $region13
    $region12: #{tpu_custom_call.1} parent=1 // pred_region
      %63 = vsyncadd [#allocation4], 0
      %s65 = sshll.u32 [#allocation5], 4
      %s66 = int_to_ptr.vmem [resolvable:$true] %s65
      %s67 = sshll.u32 %s1, 4
      %s68 = int_to_ptr.hbm [resolvable:$true] %s67
      %70 = dma.vmem_to_hbm [thread:$0]  %s66, 128, %s68, [#allocation4]
    $region13: #{tpu_custom_call.1} parent=1 // pred_fallthru
      _
    // Predicated region
    $region14: #{tpu_custom_call.1} parent=1 // pred_check
      _
    $region15: #{tpu_custom_call.1} parent=1 // pred_check_branch
      %72 = sbr.rel (0) target = $region17
    $region16: #{tpu_custom_call.1} parent=1 // pred_region
      %74 = dma.done [#allocation4], 128
    $region17: #{tpu_custom_call.1} parent=1 // pred_fallthru
      _
    %75 = vsyncpa [#allocation3], 1
    %76 = vsyncpa [#allocation4], 1

</llo_original>
